<compile_context>
chip_gen: v5e
topology: v5e:2x2
jax: 0.10.0
libtpu: 0.0.40
codegen_flags: <defaults>
</compile_context>

<pallas_src>
import functools

import jax
import jax.numpy as jnp
from jax.experimental import pallas as pl
from jax.experimental.pallas import tpu as pltpu


def _round_up(n, m):
    return (n + m - 1) // m * m


def _param_layout(n_input, n_hiddens):
    """Static row layout of the packed parameter blob.

    Blob shape: [n_rows, n_cols] fp32, each section's start row 8-aligned.
      hidden layer i: W_t rows [w_row : w_row+in_dim), cols [:out_dim)
                      bias   row  b_row,               cols [:out_dim)
      output layer:   w_out  row  wout_row,            cols [:H_last)
                      b_out  row  bout_row,            col  0
    """
    dims = [n_input] + list(n_hiddens)
    hidden_meta = []
    r = 0
    for i in range(len(n_hiddens)):
        w_row = r
        r += _round_up(dims[i], 8)
        b_row = r
        r += 8
        hidden_meta.append((w_row, dims[i], dims[i + 1], b_row))
    wout_row = r
    r += 8
    bout_row = r
    r += 8
    n_rows = r
    n_cols = max(n_hiddens)
    return tuple(hidden_meta), wout_row, bout_row, n_rows, n_cols


def _fused_mlp_kernel(x_ref, p_ref, o_ref, *,
                      hidden_meta, wout_row, bout_row, h_last):
    # x_ref: [TILE_B, n_input]   p_ref: [n_rows, n_cols]   o_ref: [TILE_B, 1]
    h = x_ref[...]
    for (w_row, in_dim, out_dim, b_row) in hidden_meta:
        w = p_ref[w_row:w_row + in_dim, :out_dim]        # [in, out] (static slice)
        b = p_ref[b_row:b_row + 1, :out_dim]             # [1, out]
        h = jnp.maximum(
            jnp.dot(h, w, preferred_element_type=jnp.float32) + b, 0.0)
    # H -> 1 output layer: VPU multiply + lane reduction (no N=1 matmul).
    w_out = p_ref[wout_row:wout_row + 1, :h_last]        # [1, H_last]
    b_out = p_ref[bout_row:bout_row + 1, 0:1]            # [1, 1]
    y = jnp.sum(h * w_out, axis=-1, keepdims=True) + b_out
    o_ref[...] = y.astype(o_ref.dtype)


def make_mlp_value_forward(n_input, n_hiddens, tile_b=256):
    """Returns forward(x, param_blob) -> [B, 1] using one fused pallas_call."""
    hidden_meta, wout_row, bout_row, n_rows, n_cols = _param_layout(
        n_input, n_hiddens)
    kernel = functools.partial(
        _fused_mlp_kernel,
        hidden_meta=hidden_meta,
        wout_row=wout_row,
        bout_row=bout_row,
        h_last=n_hiddens[-1],
    )

    def forward(x, blob):
        B = x.shape[0]
        tb = min(tile_b, _round_up(B, 8))       # TILE_B: multiple of 8
        B_pad = _round_up(B, tb)
        if B_pad != B:
            x = jnp.pad(x, ((0, B_pad - B), (0, 0)))
        grid = (B_pad // tb,)
        out = pl.pallas_call(
            kernel,
            out_shape=jax.ShapeDtypeStruct((B_pad, 1), jnp.float32),
            grid_spec=pltpu.PrefetchScalarGridSpec(
                num_scalar_prefetch=0,
                grid=grid,
                in_specs=[
                    # Batch tile of states.
                    pl.BlockSpec((tb, n_input), lambda i: (i, 0)),
                    # Whole param blob, resident across all batch tiles.
                    pl.BlockSpec((n_rows, n_cols), lambda i: (0, 0)),
                ],
                out_specs=pl.BlockSpec((tb, 1), lambda i: (i, 0)),
            ),
            compiler_params=pltpu.CompilerParams(
                # Batch axis is independent -> shards across v7x's 2 TCs.
                dimension_semantics=("parallel",)),
        )(x, blob)
        return out[:B]

    return forward


def init_mlp_value_params(key, n_input, n_hiddens):
    """PyTorch nn.Linear default init (U(-1/sqrt(fan_in), 1/sqrt(fan_in))).

    Returns raw params: [(W [out,in], b [out]) for hidden layers] +
    [(w_out [1,H_last], b_out [1])].
    """
    dims = [n_input] + list(n_hiddens)
    raw = []
    for i in range(len(n_hiddens)):
        key, kw, kb = jax.random.split(key, 3)
        bound = 1.0 / float(dims[i]) ** 0.5
        w = jax.random.uniform(kw, (dims[i + 1], dims[i]), jnp.float32,
                               -bound, bound)
        b = jax.random.uniform(kb, (dims[i + 1],), jnp.float32, -bound, bound)
        raw.append((w, b))
    key, kw, kb = jax.random.split(key, 3)
    bound = 1.0 / float(n_hiddens[-1]) ** 0.5
    w_out = jax.random.uniform(kw, (1, n_hiddens[-1]), jnp.float32,
                               -bound, bound)
    b_out = jax.random.uniform(kb, (1,), jnp.float32, -bound, bound)
    raw.append((w_out, b_out))
    return raw


def pack_mlp_value_params(raw_params, n_input, n_hiddens):
    """Pack raw params into one contiguous fp32 blob (single DMA per call)."""
    hidden_meta, wout_row, bout_row, n_rows, n_cols = _param_layout(
        n_input, n_hiddens)
    blob = jnp.zeros((n_rows, n_cols), jnp.float32)
    for (w_row, in_dim, out_dim, b_row), (w, b) in zip(hidden_meta,
                                                       raw_params[:-1]):
        blob = blob.at[w_row:w_row + in_dim, :out_dim].set(w.T)
        blob = blob.at[b_row, :out_dim].set(b)
    w_out, b_out = raw_params[-1]
    blob = blob.at[wout_row, :n_hiddens[-1]].set(w_out[0])
    blob = blob.at[bout_row, 0].set(b_out[0])
    return blob


if __name__ == "__main__":
    n_input = 16
    n_hiddens = [32, 32]
    # Batch many states per call (multiple of 8) — the kernel is pure fixed
    # overhead at tiny batches, so amortization is the dominant lever.
    B = 128

    key = jax.random.PRNGKey(0)
    key, kx = jax.random.split(key)
    x = jax.random.normal(kx, (B, n_input), jnp.float32)

    raw_params = init_mlp_value_params(key, n_input, n_hiddens)
    blob = pack_mlp_value_params(raw_params, n_input, n_hiddens)

    # TILE_B=64 -> grid=(2,) to exercise the parallel batch axis.
    forward = jax.jit(make_mlp_value_forward(n_input, n_hiddens, tile_b=64))
    out = jax.block_until_ready(forward(x, blob))

    # Reference in plain JAX (same math as the PyTorch module).
    ref = x
    for (w, b) in raw_params[:-1]:
        ref = jnp.maximum(ref @ w.T + b, 0.0)
    w_out, b_out = raw_params[-1]
    ref = ref @ w_out.T + b_out

    assert out.shape == (B, 1)
    assert jnp.allclose(out, ref, atol=1e-5, rtol=1e-5), float(
        jnp.max(jnp.abs(out - ref)))

    print("KERNEL_OK")
</pallas_src>

<mosaic_0001>
module attributes {stable_mosaic.version = 11 : i64} {
  func.func @_fused_mlp_kernel(%arg0: i32, %arg1: memref<64x16xf32, #tpu.memory_space<vmem>>, %arg2: memref<80x32xf32, #tpu.memory_space<vmem>>, %arg3: memref<64x1xf32, #tpu.memory_space<vmem>>) attributes {dimension_semantics = [#tpu.dimension_semantics<parallel>], iteration_bounds = array<i64: 2>, scalar_prefetch = 0 : i64, scratch_operands = 0 : i64, tpu.core_type = #tpu.core_type<tc>, window_params = [{transform_indices = @transform_0, window_bounds = array<i64: 64, 16>}, {pipeline_mode = #tpu.pipeline_mode<synchronous>, transform_indices = @transform_1, window_bounds = array<i64: 80, 32>}, {transform_indices = @transform_2, window_bounds = array<i64: 64, 1>}]} {
    %c0 = arith.constant 0 : index
    %c0_0 = arith.constant 0 : index
    %0 = vector.load %arg1[%c0, %c0_0] : memref<64x16xf32, #tpu.memory_space<vmem>>, vector<64x16xf32>
    %c0_1 = arith.constant 0 : index
    %c0_2 = arith.constant 0 : index
    %1 = vector.load %arg2[%c0_1, %c0_2] : memref<80x32xf32, #tpu.memory_space<vmem>>, vector<16x32xf32>
    %c16 = arith.constant 16 : index
    %c0_3 = arith.constant 0 : index
    %2 = vector.load %arg2[%c16, %c0_3] : memref<80x32xf32, #tpu.memory_space<vmem>>, vector<1x32xf32>
    %cst = arith.constant dense<0.000000e+00> : vector<64x32xf32>
    %3 = tpu.matmul %0, %1, %cst {dimension_numbers = #tpu.dot_dimension_numbers<[1], [0], [0], [1], [0, 0, 1, 1], [], []>} : vector<64x16xf32>, vector<16x32xf32>, vector<64x32xf32> -> vector<64x32xf32>
    %4 = vector.broadcast %2 : vector<1x32xf32> to vector<64x32xf32>
    %5 = arith.addf %3, %4 : vector<64x32xf32>
    %cst_4 = arith.constant 0.000000e+00 : f32
    %6 = vector.broadcast %cst_4 : f32 to vector<64x32xf32>
    %7 = arith.maximumf %5, %6 : vector<64x32xf32>
    %c24 = arith.constant 24 : index
    %c0_5 = arith.constant 0 : index
    %8 = vector.load %arg2[%c24, %c0_5] : memref<80x32xf32, #tpu.memory_space<vmem>>, vector<32x32xf32>
    %c56 = arith.constant 56 : index
    %c0_6 = arith.constant 0 : index
    %9 = vector.load %arg2[%c56, %c0_6] : memref<80x32xf32, #tpu.memory_space<vmem>>, vector<1x32xf32>
    %cst_7 = arith.constant dense<0.000000e+00> : vector<64x32xf32>
    %10 = tpu.matmul %7, %8, %cst_7 {dimension_numbers = #tpu.dot_dimension_numbers<[1], [0], [0], [1], [0, 0, 1, 1], [], []>} : vector<64x32xf32>, vector<32x32xf32>, vector<64x32xf32> -> vector<64x32xf32>
    %11 = vector.broadcast %9 : vector<1x32xf32> to vector<64x32xf32>
    %12 = arith.addf %10, %11 : vector<64x32xf32>
    %cst_8 = arith.constant 0.000000e+00 : f32
    %13 = vector.broadcast %cst_8 : f32 to vector<64x32xf32>
    %14 = arith.maximumf %12, %13 : vector<64x32xf32>
    %c64 = arith.constant 64 : index
    %c0_9 = arith.constant 0 : index
    %15 = vector.load %arg2[%c64, %c0_9] : memref<80x32xf32, #tpu.memory_space<vmem>>, vector<1x32xf32>
    %c72 = arith.constant 72 : index
    %c0_10 = arith.constant 0 : index
    %16 = vector.load %arg2[%c72, %c0_10] : memref<80x32xf32, #tpu.memory_space<vmem>>, vector<1x1xf32>
    %17 = vector.broadcast %15 : vector<1x32xf32> to vector<64x32xf32>
    %18 = arith.mulf %14, %17 : vector<64x32xf32>
    %cst_11 = arith.constant dense<0.000000e+00> : vector<64xf32>
    %19 = vector.multi_reduction <add>, %18, %cst_11 [1] : vector<64x32xf32> to vector<64xf32>
    %20 = vector.shape_cast %19 : vector<64xf32> to vector<64x1xf32>
    %21 = vector.broadcast %16 : vector<1x1xf32> to vector<64x1xf32>
    %22 = arith.addf %20, %21 : vector<64x1xf32>
    %c0_12 = arith.constant 0 : index
    %c0_13 = arith.constant 0 : index
    %23 = vector.load %arg3[%c0_12, %c0_13] : memref<64x1xf32, #tpu.memory_space<vmem>>, vector<64x1xf32>
    tpu.vector_store %arg3[%c0_12, %c0_13], %22 {strides = array<i32>} : memref<64x1xf32, #tpu.memory_space<vmem>>, vector<64x1xf32>,
    return
  }
  func.func @transform_0(%arg0: i32) -> (i32, i32) {
    %c0_i32 = arith.constant 0 : i32
    %c0_i32_0 = arith.constant 0 : i32
    return %arg0, %c0_i32 : i32, i32
  }
  func.func @transform_1(%arg0: i32) -> (i32, i32) {
    %c0_i32 = arith.constant 0 : i32
    %c0_i32_0 = arith.constant 0 : i32
    %c0_i32_1 = arith.constant 0 : i32
    return %c0_i32, %c0_i32_0 : i32, i32
  }
  func.func @transform_2(%arg0: i32) -> (i32, i32) {
    %c0_i32 = arith.constant 0 : i32
    %c0_i32_0 = arith.constant 0 : i32
    return %arg0, %c0_i32 : i32, i32
  }
}

</mosaic_0001>

<llo_original>
// kernel: forward.1
$region0: #{forward.1}
  #allocation0 [shape = 'u32[]', space=smem, size = 0x4, offset = 0x4, fixed_abs, tag = 'smem constant byte address 0x4 - core index']
  #allocation1 [shape = 'u32[72,128]{1,0:T(1,128)}', space=vmem, size = 0x9000, scoped, tag = 'internal scratch']
  %s0 = inlined_call_operand.vmem [shape: f32[128,16], index: 0, kind: input, shape index: {}]
  %s1 = inlined_call_operand.vmem [shape: f32[80,32], index: 1, kind: input, shape index: {}]
  %s2 = inlined_call_operand.vmem [shape: f32[128,1], index: 2, kind: output, shape index: {}]
  %s3 = sld [smem:[#allocation0]]
  $region41: #{forward.1} parent=0
    _
  %s5 = ssub.s32 1, %s3
  %s6 = scalar_select 0, %s5, %s3
  loop: start=0, step=1, limit=4
  $region2: #{forward.1} parent=0 // loop_pre_header
    _
  $region3: #{forward.1} parent=0 // loop_header
    %s8 = sphi 0, %s12
    %p9 = scmp.ge.s32.totalorder %s8, 4
    %s18 = sphi 0, %s20
    %s21 = sphi 0, %s18
    %s22 = sphi 0, %s21
    %s38 = sphi 0, %s22
    %s42 = sphi 0, %s42
    %s44 = sphi 0, %s42
    %s45 = sphi 0, %s44
    %s59 = sphi 0, %s45
    %s65 = sphi 0, %s67
    %s68 = sphi 0, %s65
    %s69 = sphi 0, %s68
    %s85 = sphi 0, %s69
  $region4: #{forward.1} parent=0 // loop_header_branch
    %11 = sbr.rel (%p9) target = $region8
  $region5: #{forward.1} parent=0 // loop_body
    %s13 = ssub.s32 %s8, 1
    %s14 = ssub.s32 %s8, 2
    %s15 = sadd.s32 %s8, 1
    %s16 = ssub.s32 %s8, %s15
    %p17 = scmp.eq.s32.totalorder %s16, 0
    %s19 = sadd.s32 %s18, 1
    %s20 = scalar_select %p17, %s18, %s19
    %p23 = pneg %p17
    %p24 = scmp.eq.s32.totalorder %s8, 1
    %p25 = por %p23, %p24
    %p26 = scmp.ne.s32.totalorder %s18, %s21
    %p27 = scmp.eq.s32.totalorder %s8, 0
    %p28 = por %p26, %p27
    %p29 = scmp.ne.s32.totalorder %s18, %s21
    %p30 = scmp.eq.s32.totalorder %s13, 1
    %p31 = por %p29, %p30
    %p32 = scmp.ne.s32.totalorder %s21, %s22
    %p33 = scmp.eq.s32.totalorder %s13, 0
    %p34 = por %p32, %p33
    %p35 = scmp.ne.s32.totalorder %s21, %s22
    %p36 = scmp.eq.s32.totalorder %s14, 1
    %p37 = por %p35, %p36
    %p39 = scmp.ne.s32.totalorder %s22, %s38
    %p40 = scmp.eq.s32.totalorder %s14, 0
    %p41 = por %p39, %p40
    %s43 = sadd.s32 %s42, 1
    %p46 = scmp.eq.s32.totalorder %s8, 1
    %p47 = scmp.ne.s32.totalorder %s42, %s44
    %p48 = scmp.eq.s32.totalorder %s8, 0
    %p49 = por %p47, %p48
    %p50 = scmp.ne.s32.totalorder %s42, %s44
    %p51 = scmp.eq.s32.totalorder %s13, 1
    %p52 = por %p50, %p51
    %p53 = scmp.ne.s32.totalorder %s44, %s45
    %p54 = scmp.eq.s32.totalorder %s13, 0
    %p55 = por %p53, %p54
    %p56 = scmp.ne.s32.totalorder %s44, %s45
    %p57 = scmp.eq.s32.totalorder %s14, 1
    %p58 = por %p56, %p57
    %p60 = scmp.ne.s32.totalorder %s45, %s59
    %p61 = scmp.eq.s32.totalorder %s14, 0
    %p62 = por %p60, %p61
    %s63 = ssub.s32 %s8, %s15
    %p64 = scmp.eq.s32.totalorder %s63, 0
    %s66 = sadd.s32 %s65, 1
    %s67 = scalar_select %p64, %s65, %s66
    %p70 = pneg %p64
    %p71 = scmp.eq.s32.totalorder %s8, 1
    %p72 = por %p70, %p71
    %p73 = scmp.ne.s32.totalorder %s65, %s68
    %p74 = scmp.eq.s32.totalorder %s8, 0
    %p75 = por %p73, %p74
    %p76 = scmp.ne.s32.totalorder %s65, %s68
    %p77 = scmp.eq.s32.totalorder %s13, 1
    %p78 = por %p76, %p77
    %p79 = scmp.ne.s32.totalorder %s68, %s69
    %p80 = scmp.eq.s32.totalorder %s13, 0
    %p81 = por %p79, %p80
    %p82 = scmp.ne.s32.totalorder %s68, %s69
    %p83 = scmp.eq.s32.totalorder %s14, 1
    %p84 = por %p82, %p83
    %p86 = scmp.ne.s32.totalorder %s69, %s85
    %p87 = scmp.eq.s32.totalorder %s14, 0
    %p88 = por %p86, %p87
    %p89 = scmp.le.s32.totalorder 1, %s8
    %p90 = scmp.lt.s32.totalorder %s8, 3
    %p91 = pnand %p89, %p90
    %p92 = pneg %p91
    // Predicated region
    $region9: #{forward.1} parent=5 // pred_check
      _
    $region10: #{forward.1} parent=5 // pred_check_branch
      %94 = sbr.rel (%p91) target = $region12
    $region11: #{forward.1} parent=5 // pred_region
      %s95 = ssub.s32 %s8, 1
      // Predicated region
      $region13: #{forward.1} parent=11 // pred_check
        %p96 = pneg %p55
      $region14: #{forward.1} parent=11 // pred_check_branch
        %98 = sbr.rel (%p96) target = $region16
      $region15: #{forward.1} parent=11 // pred_region
        _
      $region16: #{forward.1} parent=11 // pred_fallthru
        _
    $region12: #{forward.1} parent=5 // pred_fallthru
      _
    %p99 = scmp.lt.s32.totalorder %s8, 2
    // Predicated region
    $region17: #{forward.1} parent=5 // pred_check
      %p100 = pneg %p99
    $region18: #{forward.1} parent=5 // pred_check_branch
      %102 = sbr.rel (%p100) target = $region20
    $region19: #{forward.1} parent=5 // pred_region
      // Predicated region
      $region21: #{forward.1} parent=19 // pred_check
        %p103 = pneg %p28
      $region22: #{forward.1} parent=19 // pred_check_branch
        %105 = sbr.rel (%p103) target = $region24
      $region23: #{forward.1} parent=19 // pred_region
        %s106 = smul.u32 8, %s8
        %p107 = scmp.lt.s32.totalorder %s106, 15
        %s108 = scalar_select %p107, %s106, 15
        %s109 = smul.addr %s108, 8
        %s110 = scalar_lea.vmem %s0, %s109
        %s111 = smul.u32 8, %s8
      $region24: #{forward.1} parent=19 // pred_fallthru
        _
    $region20: #{forward.1} parent=5 // pred_fallthru
      _
    %p112 = scmp.le.s32.totalorder 1, %s8
    %p113 = scmp.lt.s32.totalorder %s8, 3
    %p114 = pnand %p112, %p113
    %p115 = pneg %p114
    // Predicated region
    $region25: #{forward.1} parent=5 // pred_check
      _
    $region26: #{forward.1} parent=5 // pred_check_branch
      %117 = sbr.rel (%p114) target = $region28
    $region27: #{forward.1} parent=5 // pred_region
      %s118 = ssub.s32 %s8, 1
      %s119 = smul.u32 8, %s13
      %p120 = scmp.lt.s32.totalorder %s119, 15
      %s121 = scalar_select %p120, %s119, 15
      %s122 = smul.addr %s121, 8
      %s123 = scalar_lea.vmem %s0, %s122
      %p124 = pneg %p34
      %p125 = pneg %p31
      %p126 = pneg %p55
      %p127 = pneg %p52
      %p128 = pneg %p81
      %p129 = pneg %p78
      %s130 = smul.u32 8, %s13
      %p131 = scmp.lt.s32.totalorder %s130, 15
      %s132 = scalar_select %p131, %s130, 15
      %s133 = smul.addr %s132, 8
      %s134 = scalar_lea.vmem %s2, %s133
      %s135 = smul.u32 8, %s13
      %p136 = scmp.lt.s32.totalorder %s135, 15
      %s137 = scalar_select %p136, %s135, 15
      %s138 = smul.addr %s137, 8
      %s139 = scalar_lea.vmem %s0, %s138
      %s140 = smul.u32 8, %s13
      %s141 = smul.u32 8, %s13
      %p142 = scmp.lt.s32.totalorder %s141, 15
      %s143 = scalar_select %p142, %s141, 15
      %s144 = smul.addr %s143, 8
      %s145 = scalar_lea.vmem %s2, %s144
      %s146 = smul.u32 8, %s13
      %v147 = vld [vmem:[%s139] sm:$0xff]
      %v148 = vld [vmem:[%s139 + $0x8] sm:$0xff]
      %v149 = vld [vmem:[%s139 + $0x10] sm:$0xff]
      %v150 = vld [vmem:[%s139 + $0x18] sm:$0xff]
      %v151 = vld [vmem:[%s139 + $0x20] sm:$0xff]
      %v152 = vld [vmem:[%s139 + $0x28] sm:$0xff]
      %v153 = vld [vmem:[%s139 + $0x30] sm:$0xff]
      %v154 = vld [vmem:[%s139 + $0x38] sm:$0xff]
      %v155 = vld [vmem:[%s1] sm:$0xff]
      %v156 = vld [vmem:[%s1 + $0x8] sm:$0xff]
      %v157 = vld [vmem:[%s1 + $0x10] sm:$0x1]
      %v158 = vperm.slane %v157, 0
      %vm159 = vcmask 130048
      %v161 = vsel %vm159, %v147, 0
      %v164 = vsel %vm159, %v148, 0
      %v167 = vsel %vm159, %v149, 0
      %v170 = vsel %vm159, %v150, 0
      %v173 = vsel %vm159, %v151, 0
      %v176 = vsel %vm159, %v152, 0
      %v179 = vsel %vm159, %v153, 0
      %v182 = vsel %vm159, %v154, 0
      %184 = vmatpush.msra.mxu0 0.0
      %185 = vmatpush.msra.mxu0 0.0
      %186 = vmatpush.msra.mxu0 0.0
      %187 = vmatpush.msra.mxu0 0.0
      %188 = vmatpush.msra.mxu0 0.0
      %189 = vmatpush.msra.mxu0 0.0
      %190 = vmatpush.msra.mxu0 0.0
      %191 = vmatpush.msra.mxu0 0.0
      %192 = vmatpush.msra.mxu0 0.0
      %193 = vmatpush.msra.mxu0 0.0
      %194 = vmatpush.msra.mxu0 0.0
      %195 = vmatpush.msra.mxu0 0.0
      %196 = vmatpush.msra.mxu0 0.0
      %197 = vmatpush.msra.mxu0 0.0
      %198 = vmatpush.msra.mxu0 %v156
      %199 = vmatpush.msra.mxu0 %v155
      %200 = vmatmul.f32.gmra.mxu0 %v161
      %v201 = vpop.f32.mrf.mxu0
      %v202 = vadd.f32 %v158, %v201
      %203 = vmatmul.f32.gmra.mxu0 %v164
      %v204 = vpop.f32.mrf.mxu0
      %v205 = vadd.f32 %v158, %v204
      %206 = vmatmul.f32.gmra.mxu0 %v167
      %v207 = vpop.f32.mrf.mxu0
      %v208 = vadd.f32 %v158, %v207
      %209 = vmatmul.f32.gmra.mxu0 %v170
      %v210 = vpop.f32.mrf.mxu0
      %v211 = vadd.f32 %v158, %v210
      %212 = vmatmul.f32.gmra.mxu0 %v173
      %v213 = vpop.f32.mrf.mxu0
      %v214 = vadd.f32 %v158, %v213
      %215 = vmatmul.f32.gmra.mxu0 %v176
      %v216 = vpop.f32.mrf.mxu0
      %v217 = vadd.f32 %v158, %v216
      %218 = vmatmul.f32.gmra.mxu0 %v179
      %v219 = vpop.f32.mrf.mxu0
      %v220 = vadd.f32 %v158, %v219
      %221 = vmatmul.f32.gmra.mxu0 %v182
      %v222 = vpop.f32.mrf.mxu0
      %v223 = vadd.f32 %v158, %v222
      %224 = vdwg.mxu0
      %v225 = vmax.f32 %v202, 0.0
      %v226 = vmax.f32 %v205, 0.0
      %v227 = vmax.f32 %v208, 0.0
      %v228 = vmax.f32 %v211, 0.0
      %v229 = vmax.f32 %v214, 0.0
      %v230 = vmax.f32 %v217, 0.0
      %v231 = vmax.f32 %v220, 0.0
      %v232 = vmax.f32 %v223, 0.0
      %v233 = vld [vmem:[%s1 + $0x18] sm:$0xff]
      %v234 = vld [vmem:[%s1 + $0x20] sm:$0xff]
      %v235 = vld [vmem:[%s1 + $0x28] sm:$0xff]
      %v236 = vld [vmem:[%s1 + $0x30] sm:$0xff]
      %v237 = vld [vmem:[%s1 + $0x38] sm:$0x1]
      %v238 = vperm.slane %v237, 0
      %vm239 = vcmask 261120
      %v241 = vsel %vm239, %v225, 0
      %v244 = vsel %vm239, %v226, 0
      %v247 = vsel %vm239, %v227, 0
      %v250 = vsel %vm239, %v228, 0
      %v253 = vsel %vm239, %v229, 0
      %v256 = vsel %vm239, %v230, 0
      %v259 = vsel %vm239, %v231, 0
      %v262 = vsel %vm239, %v232, 0
      %264 = vmatpush.msra.mxu0 0.0
      %265 = vmatpush.msra.mxu0 0.0
      %266 = vmatpush.msra.mxu0 0.0
      %267 = vmatpush.msra.mxu0 0.0
      %268 = vmatpush.msra.mxu0 0.0
      %269 = vmatpush.msra.mxu0 0.0
      %270 = vmatpush.msra.mxu0 0.0
      %271 = vmatpush.msra.mxu0 0.0
      %272 = vmatpush.msra.mxu0 0.0
      %273 = vmatpush.msra.mxu0 0.0
      %274 = vmatpush.msra.mxu0 0.0
      %275 = vmatpush.msra.mxu0 0.0
      %276 = vmatpush.msra.mxu0 %v236
      %277 = vmatpush.msra.mxu0 %v235
      %278 = vmatpush.msra.mxu0 %v234
      %279 = vmatpush.msra.mxu0 %v233
      %280 = vmatmul.f32.gmra.mxu0 %v241
      %v281 = vpop.f32.mrf.mxu0
      %v282 = vadd.f32 %v238, %v281
      %283 = vmatmul.f32.gmra.mxu0 %v244
      %v284 = vpop.f32.mrf.mxu0
      %v285 = vadd.f32 %v238, %v284
      %286 = vmatmul.f32.gmra.mxu0 %v247
      %v287 = vpop.f32.mrf.mxu0
      %v288 = vadd.f32 %v238, %v287
      %289 = vmatmul.f32.gmra.mxu0 %v250
      %v290 = vpop.f32.mrf.mxu0
      %v291 = vadd.f32 %v238, %v290
      %292 = vmatmul.f32.gmra.mxu0 %v253
      %v293 = vpop.f32.mrf.mxu0
      %v294 = vadd.f32 %v238, %v293
      %295 = vmatmul.f32.gmra.mxu0 %v256
      %v296 = vpop.f32.mrf.mxu0
      %v297 = vadd.f32 %v238, %v296
      %298 = vmatmul.f32.gmra.mxu0 %v259
      %v299 = vpop.f32.mrf.mxu0
      %v300 = vadd.f32 %v238, %v299
      %301 = vmatmul.f32.gmra.mxu0 %v262
      %v302 = vpop.f32.mrf.mxu0
      %v303 = vadd.f32 %v238, %v302
      %304 = vdwg.mxu0
      %v305 = vmax.f32 %v282, 0.0
      %v306 = vmax.f32 %v285, 0.0
      %v307 = vmax.f32 %v288, 0.0
      %v308 = vmax.f32 %v291, 0.0
      %v309 = vmax.f32 %v294, 0.0
      %v310 = vmax.f32 %v297, 0.0
      %v311 = vmax.f32 %v300, 0.0
      %v312 = vmax.f32 %v303, 0.0
      %v313 = vld [vmem:[%s1 + $0x40] sm:$0x1]
      %v314 = vld [vmem:[%s1 + $0x48] sm:$0x1]
      %v315 = vperm.slane %v313, 0
      %v316 = vmul.f32 %v305, %v315
      %v317 = vmul.f32 %v306, %v315
      %v318 = vmul.f32 %v307, %v315
      %v319 = vmul.f32 %v308, %v315
      %v320 = vmul.f32 %v309, %v315
      %v321 = vmul.f32 %v310, %v315
      %v322 = vmul.f32 %v311, %v315
      %v323 = vmul.f32 %v312, %v315
      %v324 = vsel %vm239, %v316, 0.0
      %325 = vadd.xlane.f32.xlu0 %v324
      %v326 = vpop.xlane.xlu0 %325
      %v327 = vsel %vm239, %v317, 0.0
      %328 = vadd.xlane.f32.xlu0 %v327
      %v329 = vpop.xlane.xlu0 %328
      %v330 = vsel %vm239, %v318, 0.0
      %331 = vadd.xlane.f32.xlu0 %v330
      %v332 = vpop.xlane.xlu0 %331
      %v333 = vsel %vm239, %v319, 0.0
      %334 = vadd.xlane.f32.xlu0 %v333
      %v335 = vpop.xlane.xlu0 %334
      %v336 = vsel %vm239, %v320, 0.0
      %337 = vadd.xlane.f32.xlu0 %v336
      %v338 = vpop.xlane.xlu0 %337
      %v339 = vsel %vm239, %v321, 0.0
      %340 = vadd.xlane.f32.xlu0 %v339
      %v341 = vpop.xlane.xlu0 %340
      %v342 = vsel %vm239, %v322, 0.0
      %343 = vadd.xlane.f32.xlu0 %v342
      %v344 = vpop.xlane.xlu0 %343
      %v345 = vsel %vm239, %v323, 0.0
      %346 = vadd.xlane.f32.xlu0 %v345
      %v347 = vpop.xlane.xlu0 %346
      %v348 = vperm.slane %v314, 0
      %v349 = vadd.f32 %v326, %v348
      %v350 = vadd.f32 %v329, %v348
      %v351 = vadd.f32 %v332, %v348
      %v352 = vadd.f32 %v335, %v348
      %v353 = vadd.f32 %v338, %v348
      %v354 = vadd.f32 %v341, %v348
      %v355 = vadd.f32 %v344, %v348
      %v356 = vadd.f32 %v347, %v348
      %vm357 = vcmask 7168
      %358 = vst.msk [vmem:[%s145] sm:$0xff] %vm357, %v349
      %359 = vst.msk [vmem:[%s145 + $0x8] sm:$0xff] %vm357, %v350
      %360 = vst.msk [vmem:[%s145 + $0x10] sm:$0xff] %vm357, %v351
      %361 = vst.msk [vmem:[%s145 + $0x18] sm:$0xff] %vm357, %v352
      %362 = vst.msk [vmem:[%s145 + $0x20] sm:$0xff] %vm357, %v353
      %363 = vst.msk [vmem:[%s145 + $0x28] sm:$0xff] %vm357, %v354
      %364 = vst.msk [vmem:[%s145 + $0x30] sm:$0xff] %vm357, %v355
      %365 = vst.msk [vmem:[%s145 + $0x38] sm:$0xff] %vm357, %v356
      %s366 = smul.u32 8, %s13
      %p367 = scmp.lt.s32.totalorder %s366, 15
      %s368 = scalar_select %p367, %s366, 15
      %s369 = smul.addr %s368, 8
      %s370 = scalar_lea.vmem %s2, %s369
      // Predicated region
      $region29: #{forward.1} parent=27 // pred_check
        %p371 = pneg %p78
      $region30: #{forward.1} parent=27 // pred_check_branch
        %373 = sbr.rel (%p371) target = $region32
      $region31: #{forward.1} parent=27 // pred_region
        %s374 = smul.u32 8, %s13
      $region32: #{forward.1} parent=27 // pred_fallthru
        _
    $region28: #{forward.1} parent=5 // pred_fallthru
      _
    %p375 = scmp.le.s32.totalorder 2, %s8
    // Predicated region
    $region33: #{forward.1} parent=5 // pred_check
      %p376 = pneg %p375
    $region34: #{forward.1} parent=5 // pred_check_branch
      %378 = sbr.rel (%p376) target = $region36
    $region35: #{forward.1} parent=5 // pred_region
      %s379 = ssub.s32 %s8, 2
      // Predicated region
      $region37: #{forward.1} parent=35 // pred_check
        %p380 = pneg %p84
      $region38: #{forward.1} parent=35 // pred_check_branch
        %382 = sbr.rel (%p380) target = $region40
      $region39: #{forward.1} parent=35 // pred_region
        %s383 = smul.u32 8, %s14
        %p384 = scmp.lt.s32.totalorder %s383, 15
        %s385 = scalar_select %p384, %s383, 15
        %s386 = smul.addr %s385, 8
        %s387 = scalar_lea.vmem %s2, %s386
      $region40: #{forward.1} parent=35 // pred_fallthru
        _
    $region36: #{forward.1} parent=5 // pred_fallthru
      _
  $region6: #{forward.1} parent=0 // loop_footer
    %s12 = sadd.s32 1, %s8
  $region7: #{forward.1} parent=0 // loop_footer_branch
    %7 = sbr.rel target = $region3
  $region8: #{forward.1} parent=0 // loop_exit
    _

</llo_original>
